<compile_context>
chip_gen: v6e
topology: v6e:2x2x1
jax: 0.10.0
libtpu: 0.0.40
codegen_flags: <defaults>
</compile_context>

<pallas_src>
import jax
import jax.numpy as jnp
from jax.experimental import pallas as pl
from jax.experimental.pallas import tpu as pltpu

IN_F = 101       # real input features
PAD_F = 128      # padded contraction dim for layer 1 (lane/MXU aligned)
H1 = 128
H2 = 64
OUT_F = 2        # real output classes
PAD_OUT = 128    # padded logits width inside the kernel (lane-dense softmax)
DROP = 0.2       # dropout prob (inference mode -> identity)

NEG_BIG = -1e30  # bias for padded logit columns -> exp() == 0 under softmax
MAX_TILE_B = 4096


def _round_up(n, m):
    return ((n + m - 1) // m) * m


def _choose_tile_b(batch):
    # >= 2 grid steps whenever possible (v7x has 2 TensorCores; "parallel" only
    # shards if the grid has >= 2 steps), tiles as large as practical to amortize
    # per-step overhead.  Multiple of 8 (f32 sublane tiling).
    half = _round_up(max(-(-batch // 2), 8), 8)
    return min(half, MAX_TILE_B)


def mlp_kernel(x_ref, w1_ref, b1_ref, w2_ref, b2_ref, w3_ref, b3_ref, o_ref,
               xpad_ref):
    # Stage the raw (tile_b, 101) f32 tile into a (tile_b, 128) bf16 scratch with
    # guaranteed-zero pad lanes.  Zeroed every step: with "parallel" semantics a
    # TensorCore may never execute program_id == 0, so a one-time init is unsafe.
    xpad_ref[...] = jnp.zeros_like(xpad_ref)
    xpad_ref[:, :IN_F] = x_ref[...].astype(jnp.bfloat16)
    x = xpad_ref[...]                               # (tile_b, 128) bf16, pad = 0

    # Layer 1: Linear(101->128) (K zero-padded to 128) + ReLU, f32 accumulate.
    h = jnp.dot(x, w1_ref[...], preferred_element_type=jnp.float32) + b1_ref[...]
    h = jnp.maximum(h, 0.0).astype(jnp.bfloat16)
    # TODO(synk): nn.Dropout(0.2) is identity in eval mode; a training-mode forward
    # would need pltpu.prng_seed + pltpu.prng_random_bits for the mask.

    # Layer 2: Linear(128->64) + ReLU.
    h = jnp.dot(h, w2_ref[...], preferred_element_type=jnp.float32) + b2_ref[...]
    h = jnp.maximum(h, 0.0).astype(jnp.bfloat16)

    # Output: Linear(64->2), lane-padded to 128 columns; padded columns carry a
    # -1e30 bias so they contribute exp(..) == 0 to the softmax.
    logits = jnp.dot(h, w3_ref[...], preferred_element_type=jnp.float32) + b3_ref[...]
    m = jnp.max(logits, axis=-1, keepdims=True)
    e = jnp.exp(logits - m)
    denom = jnp.sum(e, axis=-1, keepdims=True)
    probs = e * pl.reciprocal(denom, approx=True)   # EUP divide, VPU multiply

    # Only the 2 real classes are written back to HBM.
    o_ref[...] = probs[:, :OUT_F]


@jax.jit
def network_forward(x, prepared_params):
    """x: (B, 101) float array.  prepared_params: output of prepare_params()."""
    w1, b1, w2, b2, w3, b3 = prepared_params
    x = x.astype(jnp.float32)
    B = x.shape[0]
    tile_b = _choose_tile_b(B)
    grid = (pl.cdiv(B, tile_b),)

    # Weights/biases are tiny (<100 KB total): one full block each with constant
    # index_map so they are resident in VMEM and not re-fetched per grid step.
    full = lambda shape: pl.BlockSpec(shape, lambda i: (0,) * len(shape))

    return pl.pallas_call(
        mlp_kernel,
        out_shape=jax.ShapeDtypeStruct((B, OUT_F), jnp.float32),
        grid_spec=pltpu.PrefetchScalarGridSpec(
            num_scalar_prefetch=0,
            grid=grid,
            in_specs=[
                # raw x tile, f32, last dim equals the full array dim (101)
                pl.BlockSpec((tile_b, IN_F), lambda i: (i, 0)),
                full((PAD_F, H1)), full((1, H1)),        # layer 1
                full((H1, H2)), full((1, H2)),           # layer 2
                full((H2, PAD_OUT)), full((1, PAD_OUT)), # output layer (padded)
            ],
            # Narrow (tile_b, 2) output block: last dim equals the full array dim.
            out_specs=pl.BlockSpec((tile_b, OUT_F), lambda i: (i, 0)),
            scratch_shapes=[pltpu.VMEM((tile_b, PAD_F), jnp.bfloat16)],
        ),
        compiler_params=pltpu.CompilerParams(
            dimension_semantics=("parallel",),      # batch tiles shard across TCs
            vmem_limit_bytes=32 * 1024 * 1024,      # covers v5e's 16 MiB default
        ),
    )(x, w1, b1, w2, b2, w3, b3)


def prepare_params(w1, b1, w2, b2, w3, b3):
    """One-time (init-time) weight preparation: padding + bf16 casts.

    Inputs use the (in_features, out_features) layout produced by init_params
    (i.e. already transposed relative to PyTorch's nn.Linear weight)."""
    w1_p = jnp.zeros((PAD_F, H1), jnp.bfloat16).at[:IN_F, :].set(
        w1.astype(jnp.bfloat16))
    b1_p = jnp.asarray(b1, jnp.float32).reshape(1, H1)
    w2_p = w2.astype(jnp.bfloat16)
    b2_p = jnp.asarray(b2, jnp.float32).reshape(1, H2)
    w3_p = jnp.zeros((H2, PAD_OUT), jnp.bfloat16).at[:, :OUT_F].set(
        w3.astype(jnp.bfloat16))
    b3_p = jnp.full((1, PAD_OUT), NEG_BIG, jnp.float32).at[:, :OUT_F].set(
        jnp.asarray(b3, jnp.float32).reshape(1, OUT_F))
    return (w1_p, b1_p, w2_p, b2_p, w3_p, b3_p)


def init_params(key):
    # Deterministic init mimicking PyTorch Linear default:
    # U(-1/sqrt(fan_in), +1/sqrt(fan_in)), weights stored (fan_in, fan_out).
    def linear(key, fan_in, fan_out):
        kw, kb = jax.random.split(key)
        bound = 1.0 / jnp.sqrt(fan_in)
        w = jax.random.uniform(kw, (fan_in, fan_out), jnp.float32, -bound, bound)
        b = jax.random.uniform(kb, (1, fan_out), jnp.float32, -bound, bound)
        return w, b

    k1, k2, k3 = jax.random.split(key, 3)
    w1, b1 = linear(k1, IN_F, H1)
    w2, b2 = linear(k2, H1, H2)
    w3, b3 = linear(k3, H2, OUT_F)
    return w1, b1, w2, b2, w3, b3


def reference_forward(x, w1, b1, w2, b2, w3, b3):
    h = jnp.maximum(x @ w1 + b1, 0.0)
    h = jnp.maximum(h @ w2 + b2, 0.0)
    logits = h @ w3 + b3
    return jax.nn.softmax(logits, axis=1)


if __name__ == "__main__":
    key = jax.random.PRNGKey(0)
    kx, kp = jax.random.split(key)

    B = 16  # small demo batch -> tile_b = 8, grid = (2,) (exercises multi-step path)
    x = jax.random.normal(kx, (B, IN_F), jnp.float32)
    params = init_params(kp)
    prepared = prepare_params(*params)     # one-time weight prep (hoisted)

    out = network_forward(x, prepared)
    out = jax.block_until_ready(out)

    ref = reference_forward(x, *params)
    assert out.shape == (B, OUT_F)
    # bf16 matmul inputs + approx reciprocal -> looser tolerance than pure f32.
    assert jnp.allclose(out, ref, atol=2e-2, rtol=2e-2), "mismatch vs JAX reference"
    assert jnp.allclose(jnp.sum(out, axis=1), 1.0, atol=5e-3), "softmax rows must sum to 1"

    print("KERNEL_OK")
</pallas_src>

<mosaic_0001>
module attributes {stable_mosaic.version = 11 : i64} {
  func.func @mlp_kernel(%arg0: i32, %arg1: memref<8x101xf32, #tpu.memory_space<vmem>>, %arg2: memref<128x128xbf16, #tpu.memory_space<vmem>>, %arg3: memref<1x128xf32, #tpu.memory_space<vmem>>, %arg4: memref<128x64xbf16, #tpu.memory_space<vmem>>, %arg5: memref<1x64xf32, #tpu.memory_space<vmem>>, %arg6: memref<64x128xbf16, #tpu.memory_space<vmem>>, %arg7: memref<1x128xf32, #tpu.memory_space<vmem>>, %arg8: memref<8x2xf32, #tpu.memory_space<vmem>>, %arg9: memref<8x128xbf16, #tpu.memory_space<vmem>>) attributes {dimension_semantics = [#tpu.dimension_semantics<parallel>], iteration_bounds = array<i64: 2>, scalar_prefetch = 0 : i64, scratch_operands = 1 : i64, tpu.core_type = #tpu.core_type<tc>, window_params = [{transform_indices = @transform_0, window_bounds = array<i64: 8, 101>}, {pipeline_mode = #tpu.pipeline_mode<synchronous>, transform_indices = @transform_1, window_bounds = array<i64: 128, 128>}, {pipeline_mode = #tpu.pipeline_mode<synchronous>, transform_indices = @transform_2, window_bounds = array<i64: 1, 128>}, {pipeline_mode = #tpu.pipeline_mode<synchronous>, transform_indices = @transform_3, window_bounds = array<i64: 128, 64>}, {pipeline_mode = #tpu.pipeline_mode<synchronous>, transform_indices = @transform_4, window_bounds = array<i64: 1, 64>}, {pipeline_mode = #tpu.pipeline_mode<synchronous>, transform_indices = @transform_5, window_bounds = array<i64: 64, 128>}, {pipeline_mode = #tpu.pipeline_mode<synchronous>, transform_indices = @transform_6, window_bounds = array<i64: 1, 128>}, {transform_indices = @transform_7, window_bounds = array<i64: 8, 2>}]} {
    %cst = arith.constant 0.000000e+00 : bf16
    %0 = vector.broadcast %cst : bf16 to vector<8x128xbf16>
    %c0 = arith.constant 0 : index
    %c0_0 = arith.constant 0 : index
    %1 = vector.load %arg9[%c0, %c0_0] : memref<8x128xbf16, #tpu.memory_space<vmem>>, vector<8x128xbf16>
    tpu.vector_store %arg9[%c0, %c0_0], %0 {strides = array<i32>} : memref<8x128xbf16, #tpu.memory_space<vmem>>, vector<8x128xbf16>,
    %c0_1 = arith.constant 0 : index
    %c0_2 = arith.constant 0 : index
    %2 = vector.load %arg1[%c0_1, %c0_2] : memref<8x101xf32, #tpu.memory_space<vmem>>, vector<8x101xf32>
    %3 = arith.truncf %2 : vector<8x101xf32> to vector<8x101xbf16>
    %c0_3 = arith.constant 0 : index
    %c0_4 = arith.constant 0 : index
    %4 = vector.load %arg9[%c0_3, %c0_4] : memref<8x128xbf16, #tpu.memory_space<vmem>>, vector<8x101xbf16>
    tpu.vector_store %arg9[%c0_3, %c0_4], %3 {strides = array<i32>} : memref<8x128xbf16, #tpu.memory_space<vmem>>, vector<8x101xbf16>,
    %c0_5 = arith.constant 0 : index
    %c0_6 = arith.constant 0 : index
    %5 = vector.load %arg9[%c0_5, %c0_6] : memref<8x128xbf16, #tpu.memory_space<vmem>>, vector<8x128xbf16>
    %c0_7 = arith.constant 0 : index
    %c0_8 = arith.constant 0 : index
    %6 = vector.load %arg2[%c0_7, %c0_8] : memref<128x128xbf16, #tpu.memory_space<vmem>>, vector<128x128xbf16>
    %cst_9 = arith.constant dense<0.000000e+00> : vector<8x128xf32>
    %7 = tpu.matmul %5, %6, %cst_9 {dimension_numbers = #tpu.dot_dimension_numbers<[1], [0], [0], [1], [0, 0, 1, 1], [], []>} : vector<8x128xbf16>, vector<128x128xbf16>, vector<8x128xf32> -> vector<8x128xf32>
    %c0_10 = arith.constant 0 : index
    %c0_11 = arith.constant 0 : index
    %8 = vector.load %arg3[%c0_10, %c0_11] : memref<1x128xf32, #tpu.memory_space<vmem>>, vector<1x128xf32>
    %9 = vector.broadcast %8 : vector<1x128xf32> to vector<8x128xf32>
    %10 = arith.addf %7, %9 : vector<8x128xf32>
    %cst_12 = arith.constant 0.000000e+00 : f32
    %11 = vector.broadcast %cst_12 : f32 to vector<8x128xf32>
    %12 = arith.maximumf %10, %11 : vector<8x128xf32>
    %13 = arith.truncf %12 : vector<8x128xf32> to vector<8x128xbf16>
    %c0_13 = arith.constant 0 : index
    %c0_14 = arith.constant 0 : index
    %14 = vector.load %arg4[%c0_13, %c0_14] : memref<128x64xbf16, #tpu.memory_space<vmem>>, vector<128x64xbf16>
    %cst_15 = arith.constant dense<0.000000e+00> : vector<8x64xf32>
    %15 = tpu.matmul %13, %14, %cst_15 {dimension_numbers = #tpu.dot_dimension_numbers<[1], [0], [0], [1], [0, 0, 1, 1], [], []>} : vector<8x128xbf16>, vector<128x64xbf16>, vector<8x64xf32> -> vector<8x64xf32>
    %c0_16 = arith.constant 0 : index
    %c0_17 = arith.constant 0 : index
    %16 = vector.load %arg5[%c0_16, %c0_17] : memref<1x64xf32, #tpu.memory_space<vmem>>, vector<1x64xf32>
    %17 = vector.broadcast %16 : vector<1x64xf32> to vector<8x64xf32>
    %18 = arith.addf %15, %17 : vector<8x64xf32>
    %cst_18 = arith.constant 0.000000e+00 : f32
    %19 = vector.broadcast %cst_18 : f32 to vector<8x64xf32>
    %20 = arith.maximumf %18, %19 : vector<8x64xf32>
    %21 = arith.truncf %20 : vector<8x64xf32> to vector<8x64xbf16>
    %c0_19 = arith.constant 0 : index
    %c0_20 = arith.constant 0 : index
    %22 = vector.load %arg6[%c0_19, %c0_20] : memref<64x128xbf16, #tpu.memory_space<vmem>>, vector<64x128xbf16>
    %cst_21 = arith.constant dense<0.000000e+00> : vector<8x128xf32>
    %23 = tpu.matmul %21, %22, %cst_21 {dimension_numbers = #tpu.dot_dimension_numbers<[1], [0], [0], [1], [0, 0, 1, 1], [], []>} : vector<8x64xbf16>, vector<64x128xbf16>, vector<8x128xf32> -> vector<8x128xf32>
    %c0_22 = arith.constant 0 : index
    %c0_23 = arith.constant 0 : index
    %24 = vector.load %arg7[%c0_22, %c0_23] : memref<1x128xf32, #tpu.memory_space<vmem>>, vector<1x128xf32>
    %25 = vector.broadcast %24 : vector<1x128xf32> to vector<8x128xf32>
    %26 = arith.addf %23, %25 : vector<8x128xf32>
    %cst_24 = arith.constant dense<0xFF800000> : vector<8xf32>
    %27 = vector.multi_reduction <maximumf>, %26, %cst_24 [1] : vector<8x128xf32> to vector<8xf32>
    %28 = vector.shape_cast %27 : vector<8xf32> to vector<8x1xf32>
    %29 = vector.broadcast %28 : vector<8x1xf32> to vector<8x128xf32>
    %30 = arith.subf %26, %29 : vector<8x128xf32>
    %31 = math.exp %30 : vector<8x128xf32>
    %cst_25 = arith.constant dense<0.000000e+00> : vector<8xf32>
    %32 = vector.multi_reduction <add>, %31, %cst_25 [1] : vector<8x128xf32> to vector<8xf32>
    %33 = vector.shape_cast %32 : vector<8xf32> to vector<8x1xf32>
    %34 = tpu.reciprocal %33 {approx = true} : vector<8x1xf32> -> vector<8x1xf32>
    %35 = vector.broadcast %34 : vector<8x1xf32> to vector<8x128xf32>
    %36 = arith.mulf %31, %35 : vector<8x128xf32>
    %37 = vector.extract_strided_slice %36 {offsets = [0, 0], sizes = [8, 2], strides = [1, 1]} : vector<8x128xf32> to vector<8x2xf32>
    %c0_26 = arith.constant 0 : index
    %c0_27 = arith.constant 0 : index
    %38 = vector.load %arg8[%c0_26, %c0_27] : memref<8x2xf32, #tpu.memory_space<vmem>>, vector<8x2xf32>
    tpu.vector_store %arg8[%c0_26, %c0_27], %37 {strides = array<i32>} : memref<8x2xf32, #tpu.memory_space<vmem>>, vector<8x2xf32>,
    return
  }
  func.func @transform_0(%arg0: i32) -> (i32, i32) {
    %c0_i32 = arith.constant 0 : i32
    %c0_i32_0 = arith.constant 0 : i32
    return %arg0, %c0_i32 : i32, i32
  }
  func.func @transform_1(%arg0: i32) -> (i32, i32) {
    %c0_i32 = arith.constant 0 : i32
    %c0_i32_0 = arith.constant 0 : i32
    %c0_i32_1 = arith.constant 0 : i32
    return %c0_i32, %c0_i32_0 : i32, i32
  }
  func.func @transform_2(%arg0: i32) -> (i32, i32) {
    %c0_i32 = arith.constant 0 : i32
    %c0_i32_0 = arith.constant 0 : i32
    %c0_i32_1 = arith.constant 0 : i32
    return %c0_i32, %c0_i32_0 : i32, i32
  }
  func.func @transform_3(%arg0: i32) -> (i32, i32) {
    %c0_i32 = arith.constant 0 : i32
    %c0_i32_0 = arith.constant 0 : i32
    %c0_i32_1 = arith.constant 0 : i32
    return %c0_i32, %c0_i32_0 : i32, i32
  }
  func.func @transform_4(%arg0: i32) -> (i32, i32) {
    %c0_i32 = arith.constant 0 : i32
    %c0_i32_0 = arith.constant 0 : i32
    %c0_i32_1 = arith.constant 0 : i32
    return %c0_i32, %c0_i32_0 : i32, i32
  }
  func.func @transform_5(%arg0: i32) -> (i32, i32) {
    %c0_i32 = arith.constant 0 : i32
    %c0_i32_0 = arith.constant 0 : i32
    %c0_i32_1 = arith.constant 0 : i32
    return %c0_i32, %c0_i32_0 : i32, i32
  }
  func.func @transform_6(%arg0: i32) -> (i32, i32) {
    %c0_i32 = arith.constant 0 : i32
    %c0_i32_0 = arith.constant 0 : i32
    %c0_i32_1 = arith.constant 0 : i32
    return %c0_i32, %c0_i32_0 : i32, i32
  }
  func.func @transform_7(%arg0: i32) -> (i32, i32) {
    %c0_i32 = arith.constant 0 : i32
    %c0_i32_0 = arith.constant 0 : i32
    return %arg0, %c0_i32 : i32, i32
  }
}

</mosaic_0001>

<llo_original>
// kernel: network_forward.1
$region0: #{network_forward.1}
  #allocation0 [shape = 'u32[]', space=smem, size = 0x4, offset = 0x4, fixed_abs, tag = 'smem constant byte address 0x4 - core index']
  #allocation1 [shape = 'u32[144,128]{1,0:T(1,128)}', space=vmem, size = 0x12000, scoped, tag = 'internal scratch']
  #allocation2 [shape = 'bf16[8,128]{1,0:T(8,128)(2,1)}', space=vmem, size = 0x800, scoped, tag = 'scratch operand']
  %s0 = inlined_call_operand.hbm [shape: f32[16,101], index: 0, kind: input, shape index: {}]
  %s1 = inlined_call_operand.vmem [shape: bf16[128,128], index: 1, kind: input, shape index: {}]
  %s2 = inlined_call_operand.vmem [shape: f32[1,128], index: 2, kind: input, shape index: {}]
  %s3 = inlined_call_operand.vmem [shape: bf16[128,64], index: 3, kind: input, shape index: {}]
  %s4 = inlined_call_operand.vmem [shape: f32[1,64], index: 4, kind: input, shape index: {}]
  %s5 = inlined_call_operand.vmem [shape: bf16[64,128], index: 5, kind: input, shape index: {}]
  %s6 = inlined_call_operand.vmem [shape: f32[1,128], index: 6, kind: input, shape index: {}]
  %s7 = inlined_call_operand.vmem [shape: f32[16,2], index: 7, kind: output, shape index: {}]
  %s8 = sld [smem:[#allocation0]]
  $region65: #{network_forward.1} parent=0
    _
  %s10 = ssub.s32 1, %s8
  %s11 = scalar_select 0, %s10, %s8
  $region1: #{network_forward.1} parent=0
    #allocation3 [shape = 'u8[8192]{0}', space=vmem, size = 0x2000, scoped, tag = 'input window, operand 0']
    #allocation4 [shape = 's32[2]{0}', space=sflag, size = 0x8, scoped, tag = 'scoped memory for network_forward.1']
    %12 = vsyncpa [#allocation4], 0
    %s13 = scalar_lea.sflag [#allocation4], 1
    %14 = vsyncpa %s13, 0
    loop: start=0, step=1, limit=4
    $region2: #{network_forward.1} parent=1 // loop_pre_header
      _
    $region3: #{network_forward.1} parent=1 // loop_header
      %s16 = sphi 0, %s20
      %p17 = scmp.ge.s32.totalorder %s16, 4
      %s26 = sphi 0, %s28
      %s29 = sphi 0, %s26
      %s30 = sphi 0, %s29
      %s46 = sphi 0, %s30
      %s50 = sphi 0, %s50
      %s52 = sphi 0, %s50
      %s53 = sphi 0, %s52
      %s67 = sphi 0, %s53
      %s71 = sphi 0, %s71
      %s73 = sphi 0, %s71
      %s74 = sphi 0, %s73
      %s88 = sphi 0, %s74
      %s92 = sphi 0, %s92
      %s94 = sphi 0, %s92
      %s95 = sphi 0, %s94
      %s109 = sphi 0, %s95
      %s113 = sphi 0, %s113
      %s115 = sphi 0, %s113
      %s116 = sphi 0, %s115
      %s130 = sphi 0, %s116
      %s134 = sphi 0, %s134
      %s136 = sphi 0, %s134
      %s137 = sphi 0, %s136
      %s151 = sphi 0, %s137
      %s155 = sphi 0, %s155
      %s157 = sphi 0, %s155
      %s158 = sphi 0, %s157
      %s172 = sphi 0, %s158
      %s178 = sphi 0, %s180
      %s181 = sphi 0, %s178
      %s182 = sphi 0, %s181
      %s198 = sphi 0, %s182
    $region4: #{network_forward.1} parent=1 // loop_header_branch
      %19 = sbr.rel (%p17) target = $region8
    $region5: #{network_forward.1} parent=1 // loop_body
      %s21 = ssub.s32 %s16, 1
      %s22 = ssub.s32 %s16, 2
      %s23 = sadd.s32 %s16, 1
      %s24 = ssub.s32 %s16, %s23
      %p25 = scmp.eq.s32.totalorder %s24, 0
      %s27 = sadd.s32 %s26, 1
      %s28 = scalar_select %p25, %s26, %s27
      %p31 = pneg %p25
      %p32 = scmp.eq.s32.totalorder %s16, 1
      %p33 = por %p31, %p32
      %p34 = scmp.ne.s32.totalorder %s26, %s29
      %p35 = scmp.eq.s32.totalorder %s16, 0
      %p36 = por %p34, %p35
      %p37 = scmp.ne.s32.totalorder %s26, %s29
      %p38 = scmp.eq.s32.totalorder %s21, 1
      %p39 = por %p37, %p38
      %p40 = scmp.ne.s32.totalorder %s29, %s30
      %p41 = scmp.eq.s32.totalorder %s21, 0
      %p42 = por %p40, %p41
      %p43 = scmp.ne.s32.totalorder %s29, %s30
      %p44 = scmp.eq.s32.totalorder %s22, 1
      %p45 = por %p43, %p44
      %p47 = scmp.ne.s32.totalorder %s30, %s46
      %p48 = scmp.eq.s32.totalorder %s22, 0
      %p49 = por %p47, %p48
      %s51 = sadd.s32 %s50, 1
      %p54 = scmp.eq.s32.totalorder %s16, 1
      %p55 = scmp.ne.s32.totalorder %s50, %s52
      %p56 = scmp.eq.s32.totalorder %s16, 0
      %p57 = por %p55, %p56
      %p58 = scmp.ne.s32.totalorder %s50, %s52
      %p59 = scmp.eq.s32.totalorder %s21, 1
      %p60 = por %p58, %p59
      %p61 = scmp.ne.s32.totalorder %s52, %s53
      %p62 = scmp.eq.s32.totalorder %s21, 0
      %p63 = por %p61, %p62
      %p64 = scmp.ne.s32.totalorder %s52, %s53
      %p65 = scmp.eq.s32.totalorder %s22, 1
      %p66 = por %p64, %p65
      %p68 = scmp.ne.s32.totalorder %s53, %s67
      %p69 = scmp.eq.s32.totalorder %s22, 0
      %p70 = por %p68, %p69
      %s72 = sadd.s32 %s71, 1
      %p75 = scmp.eq.s32.totalorder %s16, 1
      %p76 = scmp.ne.s32.totalorder %s71, %s73
      %p77 = scmp.eq.s32.totalorder %s16, 0
      %p78 = por %p76, %p77
      %p79 = scmp.ne.s32.totalorder %s71, %s73
      %p80 = scmp.eq.s32.totalorder %s21, 1
      %p81 = por %p79, %p80
      %p82 = scmp.ne.s32.totalorder %s73, %s74
      %p83 = scmp.eq.s32.totalorder %s21, 0
      %p84 = por %p82, %p83
      %p85 = scmp.ne.s32.totalorder %s73, %s74
      %p86 = scmp.eq.s32.totalorder %s22, 1
      %p87 = por %p85, %p86
      %p89 = scmp.ne.s32.totalorder %s74, %s88
      %p90 = scmp.eq.s32.totalorder %s22, 0
      %p91 = por %p89, %p90
      %s93 = sadd.s32 %s92, 1
      %p96 = scmp.eq.s32.totalorder %s16, 1
      %p97 = scmp.ne.s32.totalorder %s92, %s94
      %p98 = scmp.eq.s32.totalorder %s16, 0
      %p99 = por %p97, %p98
      %p100 = scmp.ne.s32.totalorder %s92, %s94
      %p101 = scmp.eq.s32.totalorder %s21, 1
      %p102 = por %p100, %p101
      %p103 = scmp.ne.s32.totalorder %s94, %s95
      %p104 = scmp.eq.s32.totalorder %s21, 0
      %p105 = por %p103, %p104
      %p106 = scmp.ne.s32.totalorder %s94, %s95
      %p107 = scmp.eq.s32.totalorder %s22, 1
      %p108 = por %p106, %p107
      %p110 = scmp.ne.s32.totalorder %s95, %s109
      %p111 = scmp.eq.s32.totalorder %s22, 0
      %p112 = por %p110, %p111
      %s114 = sadd.s32 %s113, 1
      %p117 = scmp.eq.s32.totalorder %s16, 1
      %p118 = scmp.ne.s32.totalorder %s113, %s115
      %p119 = scmp.eq.s32.totalorder %s16, 0
      %p120 = por %p118, %p119
      %p121 = scmp.ne.s32.totalorder %s113, %s115
      %p122 = scmp.eq.s32.totalorder %s21, 1
      %p123 = por %p121, %p122
      %p124 = scmp.ne.s32.totalorder %s115, %s116
      %p125 = scmp.eq.s32.totalorder %s21, 0
      %p126 = por %p124, %p125
      %p127 = scmp.ne.s32.totalorder %s115, %s116
      %p128 = scmp.eq.s32.totalorder %s22, 1
      %p129 = por %p127, %p128
      %p131 = scmp.ne.s32.totalorder %s116, %s130
      %p132 = scmp.eq.s32.totalorder %s22, 0
      %p133 = por %p131, %p132
      %s135 = sadd.s32 %s134, 1
      %p138 = scmp.eq.s32.totalorder %s16, 1
      %p139 = scmp.ne.s32.totalorder %s134, %s136
      %p140 = scmp.eq.s32.totalorder %s16, 0
      %p141 = por %p139, %p140
      %p142 = scmp.ne.s32.totalorder %s134, %s136
      %p143 = scmp.eq.s32.totalorder %s21, 1
      %p144 = por %p142, %p143
      %p145 = scmp.ne.s32.totalorder %s136, %s137
      %p146 = scmp.eq.s32.totalorder %s21, 0
      %p147 = por %p145, %p146
      %p148 = scmp.ne.s32.totalorder %s136, %s137
      %p149 = scmp.eq.s32.totalorder %s22, 1
      %p150 = por %p148, %p149
      %p152 = scmp.ne.s32.totalorder %s137, %s151
      %p153 = scmp.eq.s32.totalorder %s22, 0
      %p154 = por %p152, %p153
      %s156 = sadd.s32 %s155, 1
      %p159 = scmp.eq.s32.totalorder %s16, 1
      %p160 = scmp.ne.s32.totalorder %s155, %s157
      %p161 = scmp.eq.s32.totalorder %s16, 0
      %p162 = por %p160, %p161
      %p163 = scmp.ne.s32.totalorder %s155, %s157
      %p164 = scmp.eq.s32.totalorder %s21, 1
      %p165 = por %p163, %p164
      %p166 = scmp.ne.s32.totalorder %s157, %s158
      %p167 = scmp.eq.s32.totalorder %s21, 0
      %p168 = por %p166, %p167
      %p169 = scmp.ne.s32.totalorder %s157, %s158
      %p170 = scmp.eq.s32.totalorder %s22, 1
      %p171 = por %p169, %p170
      %p173 = scmp.ne.s32.totalorder %s158, %s172
      %p174 = scmp.eq.s32.totalorder %s22, 0
      %p175 = por %p173, %p174
      %s176 = ssub.s32 %s16, %s23
      %p177 = scmp.eq.s32.totalorder %s176, 0
      %s179 = sadd.s32 %s178, 1
      %s180 = scalar_select %p177, %s178, %s179
      %p183 = pneg %p177
      %p184 = scmp.eq.s32.totalorder %s16, 1
      %p185 = por %p183, %p184
      %p186 = scmp.ne.s32.totalorder %s178, %s181
      %p187 = scmp.eq.s32.totalorder %s16, 0
      %p188 = por %p186, %p187
      %p189 = scmp.ne.s32.totalorder %s178, %s181
      %p190 = scmp.eq.s32.totalorder %s21, 1
      %p191 = por %p189, %p190
      %p192 = scmp.ne.s32.totalorder %s181, %s182
      %p193 = scmp.eq.s32.totalorder %s21, 0
      %p194 = por %p192, %p193
      %p195 = scmp.ne.s32.totalorder %s181, %s182
      %p196 = scmp.eq.s32.totalorder %s22, 1
      %p197 = por %p195, %p196
      %p199 = scmp.ne.s32.totalorder %s182, %s198
      %p200 = scmp.eq.s32.totalorder %s22, 0
      %p201 = por %p199, %p200
      %p202 = scmp.le.s32.totalorder 1, %s16
      %p203 = scmp.lt.s32.totalorder %s16, 3
      %p204 = pnand %p202, %p203
      %p205 = pneg %p204
      // Predicated region
      $region9: #{network_forward.1} parent=5 // pred_check
        _
      $region10: #{network_forward.1} parent=5 // pred_check_branch
        %207 = sbr.rel (%p204) target = $region12
      $region11: #{network_forward.1} parent=5 // pred_region
        %s208 = ssub.s32 %s16, 1
        // Predicated region
        $region13: #{network_forward.1} parent=11 // pred_check
          %p209 = pneg %p63
        $region14: #{network_forward.1} parent=11 // pred_check_branch
          %211 = sbr.rel (%p209) target = $region16
        $region15: #{network_forward.1} parent=11 // pred_region
          _
        $region16: #{network_forward.1} parent=11 // pred_fallthru
          _
        // Predicated region
        $region17: #{network_forward.1} parent=11 // pred_check
          %p212 = pneg %p84
        $region18: #{network_forward.1} parent=11 // pred_check_branch
          %214 = sbr.rel (%p212) target = $region20
        $region19: #{network_forward.1} parent=11 // pred_region
          _
        $region20: #{network_forward.1} parent=11 // pred_fallthru
          _
        // Predicated region
        $region21: #{network_forward.1} parent=11 // pred_check
          %p215 = pneg %p105
        $region22: #{network_forward.1} parent=11 // pred_check_branch
          %217 = sbr.rel (%p215) target = $region24
        $region23: #{network_forward.1} parent=11 // pred_region
          _
        $region24: #{network_forward.1} parent=11 // pred_fallthru
          _
        // Predicated region
        $region25: #{network_forward.1} parent=11 // pred_check
          %p218 = pneg %p126
        $region26: #{network_forward.1} parent=11 // pred_check_branch
          %220 = sbr.rel (%p218) target = $region28
        $region27: #{network_forward.1} parent=11 // pred_region
          _
        $region28: #{network_forward.1} parent=11 // pred_fallthru
          _
        // Predicated region
        $region29: #{network_forward.1} parent=11 // pred_check
          %p221 = pneg %p147
        $region30: #{network_forward.1} parent=11 // pred_check_branch
          %223 = sbr.rel (%p221) target = $region32
        $region31: #{network_forward.1} parent=11 // pred_region
          _
        $region32: #{network_forward.1} parent=11 // pred_fallthru
          _
        // Predicated region
        $region33: #{network_forward.1} parent=11 // pred_check
          %p224 = pneg %p168
        $region34: #{network_forward.1} parent=11 // pred_check_branch
          %226 = sbr.rel (%p224) target = $region36
        $region35: #{network_forward.1} parent=11 // pred_region
          _
        $region36: #{network_forward.1} parent=11 // pred_fallthru
          _
      $region12: #{network_forward.1} parent=5 // pred_fallthru
        _
      %p227 = scmp.lt.s32.totalorder %s16, 2
      // Predicated region
      $region37: #{network_forward.1} parent=5 // pred_check
        %p228 = pneg %p227
      $region38: #{network_forward.1} parent=5 // pred_check_branch
        %230 = sbr.rel (%p228) target = $region40
      $region39: #{network_forward.1} parent=5 // pred_region
        // Predicated region
        $region41: #{network_forward.1} parent=39 // pred_check
          %p231 = pneg %p36
        $region42: #{network_forward.1} parent=39 // pred_check_branch
          %233 = sbr.rel (%p231) target = $region44
        $region43: #{network_forward.1} parent=39 // pred_region
          %s234 = sand.u32 %s26, 1
          %s235 = scalar_lea.sflag [#allocation4], %s234
          %s236 = sand.u32 %s26, 1
          %s237 = smul.addr %s236, 8
          %s238 = scalar_lea.vmem [#allocation3], %s237
          %s240 = ssub.s32 128, 128
          %241 = vsyncadd %s235, %s240
          %s242 = smul.addr %s16, 128
          %s243 = scalar_lea.hbm %s0, %s242
          %s245 = sshll.u32 %s238, 4
          %s246 = int_to_ptr.vmem [resolvable:$true] %s245
          %248 = dma.hbm_to_vmem [thread:$0]  %s243, 128, %s246, %s235
        $region44: #{network_forward.1} parent=39 // pred_fallthru
          _
      $region40: #{network_forward.1} parent=5 // pred_fallthru
        _
      %p249 = scmp.le.s32.totalorder 1, %s16
      %p250 = scmp.lt.s32.totalorder %s16, 3
      %p251 = pnand %p249, %p250
      %p252 = pneg %p251
      // Predicated region
      $region45: #{network_forward.1} parent=5 // pred_check
        _
      $region46: #{network_forward.1} parent=5 // pred_check_branch
        %254 = sbr.rel (%p251) target = $region48
      $region47: #{network_forward.1} parent=5 // pred_region
        %s255 = ssub.s32 %s16, 1
        %s256 = sand.u32 %s29, 1
        %s257 = scalar_lea.sflag [#allocation4], %s256
        %s258 = sand.u32 %s29, 1
        %s259 = smul.addr %s258, 8
        %s260 = scalar_lea.vmem [#allocation3], %s259
        // Predicated region
        $region49: #{network_forward.1} parent=47 // pred_check
          %p261 = pneg %p42
        $region50: #{network_forward.1} parent=47 // pred_check_branch
          %263 = sbr.rel (%p261) target = $region52
        $region51: #{network_forward.1} parent=47 // pred_region
          %264 = dma.done %s257, 128
        $region52: #{network_forward.1} parent=47 // pred_fallthru
          _
        %s265 = sand.u32 %s29, 1
        %s266 = scalar_lea.sflag [#allocation4], %s265
        %s267 = sand.u32 %s29, 1
        %s268 = smul.addr %s267, 8
        %s269 = scalar_lea.vmem [#allocation3], %s268
        %p270 = pneg %p42
        %p271 = pneg %p39
        %p272 = pneg %p63
        %p273 = pneg %p60
        %p274 = pneg %p84
        %p275 = pneg %p81
        %p276 = pneg %p105
        %p277 = pneg %p102
        %p278 = pneg %p126
        %p279 = pneg %p123
        %p280 = pneg %p147
        %p281 = pneg %p144
        %p282 = pneg %p168
        %p283 = pneg %p165
        %p284 = pneg %p194
        %p285 = pneg %p191
        %p286 = scmp.lt.s32.totalorder %s21, 1
        %s287 = scalar_select %p286, %s21, 1
        %s288 = smul.addr %s287, 8
        %s289 = scalar_lea.vmem %s7, %s288
        %p290 = scmp.lt.s32.totalorder %s21, 1
        %s291 = scalar_select %p290, %s21, 1
        %s292 = smul.addr %s291, 8
        %s293 = scalar_lea.vmem %s7, %s292
        %295 = vst [vmem:[#allocation2] sm:$0xf] 0
        %v296 = vld [vmem:[%s260] sm:$0xff]
        %v297 = vpack.c.bf16 %v296, %v296
        %vm298 = vcmask 822272
        %299 = vst.msk [vmem:[#allocation2] sm:$0xf] %vm298, %v297
        %v300 = vld [vmem:[#allocation2] sm:$0xf]
        %v301 = vld [vmem:[%s1] sm:$0xf]
        %v302 = vld [vmem:[%s1 + $0x4] sm:$0xf]
        %v303 = vld [vmem:[%s1 + $0x8] sm:$0xf]
        %v304 = vld [vmem:[%s1 + $0xc] sm:$0xf]
        %v305 = vld [vmem:[%s1 + $0x10] sm:$0xf]
        %v306 = vld [vmem:[%s1 + $0x14] sm:$0xf]
        %v307 = vld [vmem:[%s1 + $0x18] sm:$0xf]
        %v308 = vld [vmem:[%s1 + $0x1c] sm:$0xf]
        %v309 = vld [vmem:[%s1 + $0x20] sm:$0xf]
        %v310 = vld [vmem:[%s1 + $0x24] sm:$0xf]
        %v311 = vld [vmem:[%s1 + $0x28] sm:$0xf]
        %v312 = vld [vmem:[%s1 + $0x2c] sm:$0xf]
        %v313 = vld [vmem:[%s1 + $0x30] sm:$0xf]
        %v314 = vld [vmem:[%s1 + $0x34] sm:$0xf]
        %v315 = vld [vmem:[%s1 + $0x38] sm:$0xf]
        %v316 = vld [vmem:[%s1 + $0x3c] sm:$0xf]
        %v317 = vld [vmem:[%s2] sm:$0x1]
        %v319 = vlaneseq
        %v320 = vshrl.u32 %v319, 7
        %v321 = vsub.s32 0, %v320
        %v322 = vrot.slane %v317, %v321
        %v340 = vunpack.c.l.b16 %v301
        %v341 = vunpack.c.l.b16 %v302
        %v342 = vunpack.c.l.b16 %v303
        %v343 = vunpack.c.l.b16 %v304
        %v344 = vunpack.c.l.b16 %v305
        %v345 = vunpack.c.l.b16 %v306
        %v346 = vunpack.c.l.b16 %v307
        %v347 = vunpack.c.l.b16 %v308
        %v348 = vunpack.c.l.b16 %v309
        %v349 = vunpack.c.l.b16 %v310
        %v350 = vunpack.c.l.b16 %v311
        %v351 = vunpack.c.l.b16 %v312
        %v352 = vunpack.c.l.b16 %v313
        %v353 = vunpack.c.l.b16 %v314
        %v354 = vunpack.c.l.b16 %v315
        %v355 = vunpack.c.l.b16 %v316
        %v356 = vpack.c.b16 %v341, %v340
        %v357 = vpack.c.b16 %v343, %v342
        %v358 = vpack.c.b16 %v345, %v344
        %v359 = vpack.c.b16 %v347, %v346
        %v360 = vpack.c.b16 %v349, %v348
        %v361 = vpack.c.b16 %v351, %v350
        %v362 = vpack.c.b16 %v353, %v352
        %v363 = vpack.c.b16 %v355, %v354
        %372 = vmatprep.subr.bf16.mxu0 0
        %373 = vmatpush1.bf16.msra.mxu0 %v363
        %374 = vmatprep.subr.bf16.mxu0 0
        %375 = vmatpush1.bf16.msra.mxu0 %v362
        %376 = vmatprep.subr.bf16.mxu0 0
        %377 = vmatpush1.bf16.msra.mxu0 %v361
        %378 = vmatprep.subr.bf16.mxu0 0
        %379 = vmatpush1.bf16.msra.mxu0 %v360
        %380 = vmatprep.subr.bf16.mxu0 0
        %381 = vmatpush1.bf16.msra.mxu0 %v359
        %382 = vmatprep.subr.bf16.mxu0 0
        %383 = vmatpush1.bf16.msra.mxu0 %v358
        %384 = vmatprep.subr.bf16.mxu0 0
        %385 = vmatpush1.bf16.msra.mxu0 %v357
        %386 = vmatprep.subr.bf16.mxu0 0
        %387 = vmatpush1.bf16.msra.mxu0 %v356
        %388 = vmatprep.subr.bf16.mxu0 0
        %389 = vmatpush2.bf16.msra.mxu0 0
        %390 = vmatprep.subr.bf16.mxu0 0
        %391 = vmatpush2.bf16.msra.mxu0 0
        %392 = vmatprep.subr.bf16.mxu0 0
        %393 = vmatpush2.bf16.msra.mxu0 0
        %394 = vmatprep.subr.bf16.mxu0 0
        %395 = vmatpush2.bf16.msra.mxu0 0
        %396 = vmatprep.subr.bf16.mxu0 0
        %397 = vmatpush2.bf16.msra.mxu0 0
        %398 = vmatprep.subr.bf16.mxu0 0
        %399 = vmatpush2.bf16.msra.mxu0 0
        %400 = vmatprep.subr.bf16.mxu0 0
        %401 = vmatpush2.bf16.msra.mxu0 0
        %402 = vmatprep.subr.bf16.mxu0 0
        %403 = vmatpush2.bf16.msra.mxu0 0
        %404 = vmatprep.mubr.bf16.mxu0 0
        %405 = vmatmul.mubr.bf16.gmra.mxu0 %v300
        %v406 = vpop.f32.mrf.mxu0
        %v407 = vadd.f32 %v322, %v406
        %v408 = vpop.f32.mrf.mxu0
        %v409 = vpop.f32.mrf.mxu0
        %v410 = vpop.f32.mrf.mxu0
        %411 = vdwg.mxu0
        %v412 = vmax.f32 %v407, 0.0
        %v413 = vpack.c.bf16 %v412, %v412
        %v414 = vld [vmem:[%s3] sm:$0xf]
        %v415 = vld [vmem:[%s3 + $0x4] sm:$0xf]
        %v416 = vld [vmem:[%s3 + $0x8] sm:$0xf]
        %v417 = vld [vmem:[%s3 + $0xc] sm:$0xf]
        %v418 = vld [vmem:[%s3 + $0x10] sm:$0xf]
        %v419 = vld [vmem:[%s3 + $0x14] sm:$0xf]
        %v420 = vld [vmem:[%s3 + $0x18] sm:$0xf]
        %v421 = vld [vmem:[%s3 + $0x1c] sm:$0xf]
        %v422 = vld [vmem:[%s3 + $0x20] sm:$0xf]
        %v423 = vld [vmem:[%s3 + $0x24] sm:$0xf]
        %v424 = vld [vmem:[%s3 + $0x28] sm:$0xf]
        %v425 = vld [vmem:[%s3 + $0x2c] sm:$0xf]
        %v426 = vld [vmem:[%s3 + $0x30] sm:$0xf]
        %v427 = vld [vmem:[%s3 + $0x34] sm:$0xf]
        %v428 = vld [vmem:[%s3 + $0x38] sm:$0xf]
        %v429 = vld [vmem:[%s3 + $0x3c] sm:$0xf]
        %v430 = vld [vmem:[%s4] sm:$0x1]
        %v432 = vlaneseq
        %v433 = vshrl.u32 %v432, 7
        %v434 = vsub.s32 0, %v433
        %v435 = vrot.slane %v430, %v434
        %v453 = vunpack.c.l.b16 %v414
        %v454 = vunpack.c.l.b16 %v415
        %v455 = vunpack.c.l.b16 %v416
        %v456 = vunpack.c.l.b16 %v417
        %v457 = vunpack.c.l.b16 %v418
        %v458 = vunpack.c.l.b16 %v419
        %v459 = vunpack.c.l.b16 %v420
        %v460 = vunpack.c.l.b16 %v421
        %v461 = vunpack.c.l.b16 %v422
        %v462 = vunpack.c.l.b16 %v423
        %v463 = vunpack.c.l.b16 %v424
        %v464 = vunpack.c.l.b16 %v425
        %v465 = vunpack.c.l.b16 %v426
        %v466 = vunpack.c.l.b16 %v427
        %v467 = vunpack.c.l.b16 %v428
        %v468 = vunpack.c.l.b16 %v429
        %v469 = vpack.c.b16 %v454, %v453
        %v470 = vpack.c.b16 %v456, %v455
        %v471 = vpack.c.b16 %v458, %v457
        %v472 = vpack.c.b16 %v460, %v459
        %v473 = vpack.c.b16 %v462, %v461
        %v474 = vpack.c.b16 %v464, %v463
        %v475 = vpack.c.b16 %v466, %v465
        %v476 = vpack.c.b16 %v468, %v467
        %485 = vmatprep.subr.bf16.mxu0 0
        %486 = vmatpush1.bf16.msra.mxu0 %v476
        %487 = vmatprep.subr.bf16.mxu0 0
        %488 = vmatpush1.bf16.msra.mxu0 %v475
        %489 = vmatprep.subr.bf16.mxu0 0
        %490 = vmatpush1.bf16.msra.mxu0 %v474
        %491 = vmatprep.subr.bf16.mxu0 0
        %492 = vmatpush1.bf16.msra.mxu0 %v473
        %493 = vmatprep.subr.bf16.mxu0 0
        %494 = vmatpush1.bf16.msra.mxu0 %v472
        %495 = vmatprep.subr.bf16.mxu0 0
        %496 = vmatpush1.bf16.msra.mxu0 %v471
        %497 = vmatprep.subr.bf16.mxu0 0
        %498 = vmatpush1.bf16.msra.mxu0 %v470
        %499 = vmatprep.subr.bf16.mxu0 0
        %500 = vmatpush1.bf16.msra.mxu0 %v469
        %501 = vmatprep.subr.bf16.mxu0 0
        %502 = vmatpush2.bf16.msra.mxu0 0
        %503 = vmatprep.subr.bf16.mxu0 0
        %504 = vmatpush2.bf16.msra.mxu0 0
        %505 = vmatprep.subr.bf16.mxu0 0
        %506 = vmatpush2.bf16.msra.mxu0 0
        %507 = vmatprep.subr.bf16.mxu0 0
        %508 = vmatpush2.bf16.msra.mxu0 0
        %509 = vmatprep.subr.bf16.mxu0 0
        %510 = vmatpush2.bf16.msra.mxu0 0
        %511 = vmatprep.subr.bf16.mxu0 0
        %512 = vmatpush2.bf16.msra.mxu0 0
        %513 = vmatprep.subr.bf16.mxu0 0
        %514 = vmatpush2.bf16.msra.mxu0 0
        %515 = vmatprep.subr.bf16.mxu0 0
        %516 = vmatpush2.bf16.msra.mxu0 0
        %517 = vmatprep.mubr.bf16.mxu0 0
        %518 = vmatmul.mubr.bf16.gmra.mxu0 %v413
        %v519 = vpop.f32.mrf.mxu0
        %v520 = vadd.f32 %v435, %v519
        %v521 = vpop.f32.mrf.mxu0
        %v522 = vpop.f32.mrf.mxu0
        %v523 = vpop.f32.mrf.mxu0
        %524 = vdwg.mxu0
        %v525 = vmax.f32 %v520, 0.0
        %v526 = vpack.c.bf16 %v525, %v525
        %v527 = vld [vmem:[%s5] sm:$0xf]
        %v528 = vld [vmem:[%s5 + $0x4] sm:$0xf]
        %v529 = vld [vmem:[%s5 + $0x8] sm:$0xf]
        %v530 = vld [vmem:[%s5 + $0xc] sm:$0xf]
        %v531 = vld [vmem:[%s5 + $0x10] sm:$0xf]
        %v532 = vld [vmem:[%s5 + $0x14] sm:$0xf]
        %v533 = vld [vmem:[%s5 + $0x18] sm:$0xf]
        %v534 = vld [vmem:[%s5 + $0x1c] sm:$0xf]
        %v535 = vld [vmem:[%s6] sm:$0x1]
        %v537 = vlaneseq
        %v538 = vshrl.u32 %v537, 7
        %v539 = vsub.s32 0, %v538
        %v540 = vrot.slane %v535, %v539
        %v550 = vunpack.c.l.b16 %v527
        %v551 = vunpack.c.l.b16 %v528
        %v552 = vunpack.c.l.b16 %v529
        %v553 = vunpack.c.l.b16 %v530
        %v554 = vunpack.c.l.b16 %v531
        %v555 = vunpack.c.l.b16 %v532
        %v556 = vunpack.c.l.b16 %v533
        %v557 = vunpack.c.l.b16 %v534
        %v558 = vpack.c.b16 %v551, %v550
        %v559 = vpack.c.b16 %v553, %v552
        %v560 = vpack.c.b16 %v555, %v554
        %v561 = vpack.c.b16 %v557, %v556
        %vm566 = vcmask 523264
        %v568 = vsel %vm566, %v526, 0
        %570 = vmatprep.subr.bf16.mxu0 0
        %571 = vmatpush1.bf16.msra.mxu0 0
        %572 = vmatprep.subr.bf16.mxu0 0
        %573 = vmatpush1.bf16.msra.mxu0 0
        %574 = vmatprep.subr.bf16.mxu0 0
        %575 = vmatpush1.bf16.msra.mxu0 0
        %576 = vmatprep.subr.bf16.mxu0 0
        %577 = vmatpush1.bf16.msra.mxu0 0
        %578 = vmatprep.subr.bf16.mxu0 0
        %579 = vmatpush1.bf16.msra.mxu0 %v561
        %580 = vmatprep.subr.bf16.mxu0 0
        %581 = vmatpush1.bf16.msra.mxu0 %v560
        %582 = vmatprep.subr.bf16.mxu0 0
        %583 = vmatpush1.bf16.msra.mxu0 %v559
        %584 = vmatprep.subr.bf16.mxu0 0
        %585 = vmatpush1.bf16.msra.mxu0 %v558
        %586 = vmatprep.subr.bf16.mxu0 0
        %587 = vmatpush2.bf16.msra.mxu0 0
        %588 = vmatprep.subr.bf16.mxu0 0
        %589 = vmatpush2.bf16.msra.mxu0 0
        %590 = vmatprep.subr.bf16.mxu0 0
        %591 = vmatpush2.bf16.msra.mxu0 0
        %592 = vmatprep.subr.bf16.mxu0 0
        %593 = vmatpush2.bf16.msra.mxu0 0
        %594 = vmatprep.subr.bf16.mxu0 0
        %595 = vmatpush2.bf16.msra.mxu0 0
        %596 = vmatprep.subr.bf16.mxu0 0
        %597 = vmatpush2.bf16.msra.mxu0 0
        %598 = vmatprep.subr.bf16.mxu0 0
        %599 = vmatpush2.bf16.msra.mxu0 0
        %600 = vmatprep.subr.bf16.mxu0 0
        %601 = vmatpush2.bf16.msra.mxu0 0
        %602 = vmatprep.mubr.bf16.mxu0 0
        %603 = vmatmul.mubr.bf16.gmra.mxu0 %v568
        %v604 = vpop.f32.mrf.mxu0
        %v605 = vadd.f32 %v540, %v604
        %v606 = vpop.f32.mrf.mxu0
        %v607 = vpop.f32.mrf.mxu0
        %v608 = vpop.f32.mrf.mxu0
        %609 = vdwg.mxu0
        %610 = vmax.xlane.f32.xlu0 %v605
        %v611 = vpop.xlane.xlu0 %610
        %v612 = vsub.f32 %v605, %v611
        %v613 = vmul.f32 %v612, 1.442695
        %v614 = vpow.pop %v613
        %615 = vadd.xlane.f32.xlu0 %v614
        %v616 = vpop.xlane.xlu0 %615
        %v617 = vrcp.pop %v616
        %v618 = vmul.f32 %v614, %v617
        %vm619 = vcmask 15360
        %620 = vst.msk [vmem:[%s293] sm:$0xff] %vm619, %v618
        %p621 = scmp.lt.s32.totalorder %s21, 1
        %s622 = scalar_select %p621, %s21, 1
        %s623 = smul.addr %s622, 8
        %s624 = scalar_lea.vmem %s7, %s623
        // Predicated region
        $region53: #{network_forward.1} parent=47 // pred_check
          %p625 = pneg %p191
        $region54: #{network_forward.1} parent=47 // pred_check_branch
          %627 = sbr.rel (%p625) target = $region56
        $region55: #{network_forward.1} parent=47 // pred_region
          _
        $region56: #{network_forward.1} parent=47 // pred_fallthru
          _
      $region48: #{network_forward.1} parent=5 // pred_fallthru
        _
      %p628 = scmp.le.s32.totalorder 2, %s16
      // Predicated region
      $region57: #{network_forward.1} parent=5 // pred_check
        %p629 = pneg %p628
      $region58: #{network_forward.1} parent=5 // pred_check_branch
        %631 = sbr.rel (%p629) target = $region60
      $region59: #{network_forward.1} parent=5 // pred_region
        %s632 = ssub.s32 %s16, 2
        // Predicated region
        $region61: #{network_forward.1} parent=59 // pred_check
          %p633 = pneg %p197
        $region62: #{network_forward.1} parent=59 // pred_check_branch
          %635 = sbr.rel (%p633) target = $region64
        $region63: #{network_forward.1} parent=59 // pred_region
          %p636 = scmp.lt.s32.totalorder %s22, 1
          %s637 = scalar_select %p636, %s22, 1
          %s638 = smul.addr %s637, 8
          %s639 = scalar_lea.vmem %s7, %s638
        $region64: #{network_forward.1} parent=59 // pred_fallthru
          _
      $region60: #{network_forward.1} parent=5 // pred_fallthru
        _
    $region6: #{network_forward.1} parent=1 // loop_footer
      %s20 = sadd.s32 1, %s16
    $region7: #{network_forward.1} parent=1 // loop_footer_branch
      %15 = sbr.rel target = $region3
    $region8: #{network_forward.1} parent=1 // loop_exit
      _
    %640 = vsyncpa [#allocation4], 1
    %s641 = scalar_lea.sflag [#allocation4], 1
    %642 = vsyncpa %s641, 1

</llo_original>
